<compile_context>
chip_gen: v7x
topology: tpu7x:2x2x1
jax: 0.10.0
libtpu: 0.0.40
codegen_flags: <defaults>
</compile_context>

<pallas_src>
import functools

import jax
import jax.numpy as jnp
from jax import lax
from jax.experimental import pallas as pl
from jax.experimental.pallas import tpu as pltpu


def _round_up(x, m):
    return ((x + m - 1) // m) * m


def _bmm_kernel(x2_ref, x1_ref, o_ref):
    # x2_ref : (1, tm, tk)  -- LHS tile of x2[b]                 (M x K)
    # x1_ref : (1, tn, tk)  -- tile of x1.transpose(1, 0, 2)[b]  (N x K)
    # o_ref  : (1, tm, tn)  -- output tile, VMEM-resident across the K axis
    @pl.when(pl.program_id(3) == 0)
    def _():
        o_ref[...] = jnp.zeros_like(o_ref)

    # A @ B^T: contract the lane (K) axis of both operands on the MXU.
    # TODO(synk): for sub-f32 output dtypes keep an f32 VMEM scratch
    # accumulator instead of accumulating directly into o_ref.
    o_ref[0] += lax.dot_general(
        x2_ref[0], x1_ref[0],
        dimension_numbers=(((1,), (1,)), ((), ())),
        preferred_element_type=jnp.float32,
    ).astype(o_ref.dtype)


@functools.partial(jax.jit, static_argnames=("tm", "tn", "tk"))
def permute_bmm(x1, x2, *, tm=512, tn=512, tk=1024):
    """torch.bmm(x2, x1.permute(1, 2, 0)) as a Pallas TPU kernel.

    x1: (N, B, K), x2: (B, M, K)  ->  (B, M, N)
    """
    N, B, K = x1.shape
    B2, M, K2 = x2.shape
    assert B == B2 and K == K2, (x1.shape, x2.shape)
    out_dtype = jnp.promote_types(x1.dtype, x2.dtype)

    # Single cheap re-layout (sublane reorder only; K stays contiguous):
    # (N, B, K) -> (B, N, K).  The expensive lane transpose implied by the
    # original permute(1, 2, 0) is absorbed by the in-kernel trans-B matmul.
    x1t = jnp.transpose(x1, (1, 0, 2))

    # Full-dim tiles whenever the dim fits in one tile: always legal (block
    # dim == array dim) and avoids every pad / output-slice HBM pass.
    tm = M if M <= tm else tm          # sublane axis of LHS / output
    tn = N if N <= tn else tn          # sublane axis of RHS, lane axis of out
    tk = K if K <= tk else tk          # lane (contraction) axis

    Mp, Np, Kp = _round_up(M, tm), _round_up(N, tn), _round_up(K, tk)

    if (Mp, Kp) != (M, K):             # K zero-padding is exact for the sum
        x2 = jnp.pad(x2, ((0, 0), (0, Mp - M), (0, Kp - K)))
    if (Np, Kp) != (N, K):
        x1t = jnp.pad(x1t, ((0, 0), (0, Np - N), (0, Kp - K)))

    grid = (B, Mp // tm, Np // tn, Kp // tk)

    out = pl.pallas_call(
        _bmm_kernel,
        out_shape=jax.ShapeDtypeStruct((B, Mp, Np), out_dtype),
        grid=grid,
        in_specs=[
            pl.BlockSpec((1, tm, tk), lambda b, i, j, k: (b, i, k)),
            pl.BlockSpec((1, tn, tk), lambda b, i, j, k: (b, j, k)),
        ],
        out_specs=pl.BlockSpec((1, tm, tn), lambda b, i, j, k: (b, i, j)),
        compiler_params=pltpu.CompilerParams(
            dimension_semantics=("parallel", "parallel", "parallel", "arbitrary"),
            vmem_limit_bytes=32 * 1024 * 1024,
        ),
    )(x2, x1t)

    if (Mp, Np) != (M, N):
        out = out[:, :M, :N]
    return out


if __name__ == "__main__":
    # Shapes consistent with the forward pass:
    #   x1: (N, B, K), x2: (B, M, K)  ->  out: (B, M, N)
    B, M, K, N = 2, 8, 32, 16

    key = jax.random.PRNGKey(0)
    k1, k2 = jax.random.split(key)
    x1 = jax.random.normal(k1, (N, B, K), dtype=jnp.float32)
    x2 = jax.random.normal(k2, (B, M, K), dtype=jnp.float32)

    out = jax.block_until_ready(permute_bmm(x1, x2))

    # Reference: exact semantics of the PyTorch module.
    v1 = jnp.transpose(x1, (1, 2, 0))                 # permute(1, 2, 0)
    ref = jnp.einsum("bmk,bkn->bmn", x2, v1)          # torch.bmm(x2, v1)
    assert out.shape == (B, M, N), out.shape
    assert jnp.allclose(out, ref, atol=1e-5, rtol=1e-5)

    print("KERNEL_OK")
</pallas_src>

<mosaic_0001>
module attributes {stable_mosaic.version = 11 : i64} {
  func.func @_bmm_kernel(%arg0: i32, %arg1: i32, %arg2: i32, %arg3: i32, %arg4: memref<1x8x32xf32, #tpu.memory_space<vmem>>, %arg5: memref<1x16x32xf32, #tpu.memory_space<vmem>>, %arg6: memref<1x8x16xf32, #tpu.memory_space<vmem>>) attributes {dimension_semantics = [#tpu.dimension_semantics<parallel>, #tpu.dimension_semantics<parallel>, #tpu.dimension_semantics<parallel>, #tpu.dimension_semantics<arbitrary>], iteration_bounds = array<i64: 2, 1, 1, 1>, scalar_prefetch = 0 : i64, scratch_operands = 0 : i64, tpu.core_type = #tpu.core_type<tc>, window_params = [{transform_indices = @transform_0, window_bounds = array<i64: 1, 8, 32>}, {transform_indices = @transform_1, window_bounds = array<i64: 1, 16, 32>}, {transform_indices = @transform_2, window_bounds = array<i64: 1, 8, 16>}]} {
    %c0_i32 = arith.constant 0 : i32
    %0 = arith.cmpi eq, %arg3, %c0_i32 : i32
    %1 = arith.extui %0 : i1 to i32
    %c0_i32_0 = arith.constant 0 : i32
    %2 = arith.cmpi ne, %1, %c0_i32_0 : i32
    scf.if %2 {
      %cst_12 = arith.constant 0.000000e+00 : f32
      %14 = vector.broadcast %cst_12 : f32 to vector<1x8x16xf32>
      %c0_13 = arith.constant 0 : index
      %c0_14 = arith.constant 0 : index
      %c0_15 = arith.constant 0 : index
      %15 = vector.load %arg6[%c0_13, %c0_14, %c0_15] : memref<1x8x16xf32, #tpu.memory_space<vmem>>, vector<1x8x16xf32>
      tpu.vector_store %arg6[%c0_13, %c0_14, %c0_15], %14 {strides = array<i32>} : memref<1x8x16xf32, #tpu.memory_space<vmem>>, vector<1x8x16xf32>,
    } else {
    }
    %c0 = arith.constant 0 : index
    %c0_1 = arith.constant 0 : index
    %c0_2 = arith.constant 0 : index
    %3 = vector.load %arg6[%c0, %c0_1, %c0_2] : memref<1x8x16xf32, #tpu.memory_space<vmem>>, vector<1x8x16xf32>
    %4 = vector.shape_cast %3 : vector<1x8x16xf32> to vector<8x16xf32>
    %c0_3 = arith.constant 0 : index
    %c0_4 = arith.constant 0 : index
    %c0_5 = arith.constant 0 : index
    %5 = vector.load %arg4[%c0_3, %c0_4, %c0_5] : memref<1x8x32xf32, #tpu.memory_space<vmem>>, vector<1x8x32xf32>
    %6 = vector.shape_cast %5 : vector<1x8x32xf32> to vector<8x32xf32>
    %c0_6 = arith.constant 0 : index
    %c0_7 = arith.constant 0 : index
    %c0_8 = arith.constant 0 : index
    %7 = vector.load %arg5[%c0_6, %c0_7, %c0_8] : memref<1x16x32xf32, #tpu.memory_space<vmem>>, vector<1x16x32xf32>
    %8 = vector.shape_cast %7 : vector<1x16x32xf32> to vector<16x32xf32>
    %cst = arith.constant dense<0.000000e+00> : vector<8x16xf32>
    %9 = tpu.matmul %6, %8, %cst {dimension_numbers = #tpu.dot_dimension_numbers<[1], [1], [0], [0], [0, 0, 1, 0], [], []>} : vector<8x32xf32>, vector<16x32xf32>, vector<8x16xf32> -> vector<8x16xf32>
    %10 = arith.addf %4, %9 : vector<8x16xf32>
    %c0_9 = arith.constant 0 : index
    %c0_10 = arith.constant 0 : index
    %c0_11 = arith.constant 0 : index
    %11 = vector.load %arg6[%c0_9, %c0_10, %c0_11] : memref<1x8x16xf32, #tpu.memory_space<vmem>>, vector<1x8x16xf32>
    %12 = vector.shape_cast %11 : vector<1x8x16xf32> to vector<8x16xf32>
    %13 = vector.shape_cast %10 : vector<8x16xf32> to vector<1x8x16xf32>
    tpu.vector_store %arg6[%c0_9, %c0_10, %c0_11], %13 {strides = array<i32>} : memref<1x8x16xf32, #tpu.memory_space<vmem>>, vector<1x8x16xf32>,
    return
  }
  func.func @transform_0(%arg0: i32, %arg1: i32, %arg2: i32, %arg3: i32) -> (i32, i32, i32) {
    %c0_i32 = arith.constant 0 : i32
    return %arg0, %arg1, %arg3 : i32, i32, i32
  }
  func.func @transform_1(%arg0: i32, %arg1: i32, %arg2: i32, %arg3: i32) -> (i32, i32, i32) {
    %c0_i32 = arith.constant 0 : i32
    return %arg0, %arg2, %arg3 : i32, i32, i32
  }
  func.func @transform_2(%arg0: i32, %arg1: i32, %arg2: i32, %arg3: i32) -> (i32, i32, i32) {
    %c0_i32 = arith.constant 0 : i32
    return %arg0, %arg1, %arg2 : i32, i32, i32
  }
}

</mosaic_0001>

<llo_original>
// kernel: permute_bmm.1
$region0: #{permute_bmm.1}
  #allocation0 [shape = 'u32[]', space=smem, size = 0x4, offset = 0x4, fixed_abs, tag = 'smem constant byte address 0x4 - core index']
  #allocation1 [shape = 'u32[144,128]{1,0:T(1,128)}', space=vmem, size = 0x12000, scoped, tag = 'internal scratch']
  %s0 = inlined_call_operand.vmem [shape: f32[2,8,32], index: 0, kind: input, shape index: {}]
  %s1 = inlined_call_operand.vmem [shape: f32[2,16,32], index: 1, kind: input, shape index: {}]
  %s2 = inlined_call_operand.hbm [shape: f32[2,8,16], index: 2, kind: output, shape index: {}]
  %s3 = sld [smem:[#allocation0]]
  $region45: #{permute_bmm.1} parent=0
    _
  %s5 = ssub.s32 1, %s3
  %s6 = scalar_select 0, %s5, %s3
  $region1: #{permute_bmm.1} parent=0
    #allocation2 [shape = 'u8[8192]{0}', space=vmem, size = 0x2000, scoped, tag = 'output window, operand 0']
    #allocation3 [shape = 's32[2]{0}', space=sflag, size = 0x8, scoped, tag = 'scoped memory for permute_bmm.1']
    %7 = vsyncpa [#allocation3], 0
    %s8 = scalar_lea.sflag [#allocation3], 1
    %9 = vsyncpa %s8, 0
    loop: start=0, step=1, limit=4
    $region2: #{permute_bmm.1} parent=1 // loop_pre_header
      _
    $region3: #{permute_bmm.1} parent=1 // loop_header
      %s11 = sphi 0, %s15
      %p12 = scmp.ge.s32.totalorder %s11, 4
      %s18 = sphi 0, %s44
      %s19 = sphi 0, %s40
      %s20 = sphi 0, %s36
      %s21 = sphi 0, %s32
      %s22 = sphi 0, %s18
      %s23 = sphi 0, %s19
      %s24 = sphi 0, %s20
      %s25 = sphi 0, %s21
      %s26 = sphi 0, %s22
      %s27 = sphi 0, %s23
      %s28 = sphi 0, %s24
      %s29 = sphi 0, %s25
      %s51 = sphi 0, %s53
      %s54 = sphi 0, %s51
      %s55 = sphi 0, %s54
      %s71 = sphi 0, %s55
      %s81 = sphi 0, %s83
      %s84 = sphi 0, %s81
      %s85 = sphi 0, %s84
      %s101 = sphi 0, %s85
      %s111 = sphi 0, %s113
      %s114 = sphi 0, %s111
      %s115 = sphi 0, %s114
      %s131 = sphi 0, %s115
    $region4: #{permute_bmm.1} parent=1 // loop_header_branch
      %14 = sbr.rel (%p12) target = $region8
    $region5: #{permute_bmm.1} parent=1 // loop_body
      %s16 = ssub.s32 %s11, 1
      %s17 = ssub.s32 %s11, 2
      %s30 = sadd.s32 1, %s21
      %p31 = scmp.ge.s32.totalorder %s30, 1
      %s32 = scalar_select %p31, 0, %s30
      %s33 = sadd.s32 1, %s20
      %s34 = scalar_select %p31, %s33, %s20
      %p35 = scmp.ge.s32.totalorder %s34, 1
      %s36 = scalar_select %p35, 0, %s34
      %s37 = sadd.s32 1, %s19
      %s38 = scalar_select %p35, %s37, %s19
      %p39 = scmp.ge.s32.totalorder %s38, 1
      %s40 = scalar_select %p39, 0, %s38
      %s41 = sadd.s32 1, %s18
      %s42 = scalar_select %p39, %s41, %s18
      %p43 = scmp.ge.s32.totalorder %s42, 2
      %s44 = scalar_select %p43, 0, %s42
      %s45 = ssub.s32 %s18, %s44
      %s46 = ssub.s32 %s19, %s40
      %s47 = sor.u32 %s45, %s46
      %s48 = ssub.s32 %s21, %s32
      %s49 = sor.u32 %s47, %s48
      %p50 = scmp.eq.s32.totalorder %s49, 0
      %s52 = sadd.s32 %s51, 1
      %s53 = scalar_select %p50, %s51, %s52
      %p56 = pneg %p50
      %p57 = scmp.eq.s32.totalorder %s11, 1
      %p58 = por %p56, %p57
      %p59 = scmp.ne.s32.totalorder %s51, %s54
      %p60 = scmp.eq.s32.totalorder %s11, 0
      %p61 = por %p59, %p60
      %p62 = scmp.ne.s32.totalorder %s51, %s54
      %p63 = scmp.eq.s32.totalorder %s16, 1
      %p64 = por %p62, %p63
      %p65 = scmp.ne.s32.totalorder %s54, %s55
      %p66 = scmp.eq.s32.totalorder %s16, 0
      %p67 = por %p65, %p66
      %p68 = scmp.ne.s32.totalorder %s54, %s55
      %p69 = scmp.eq.s32.totalorder %s17, 1
      %p70 = por %p68, %p69
      %p72 = scmp.ne.s32.totalorder %s55, %s71
      %p73 = scmp.eq.s32.totalorder %s17, 0
      %p74 = por %p72, %p73
      %s75 = ssub.s32 %s18, %s44
      %s76 = ssub.s32 %s20, %s36
      %s77 = sor.u32 %s75, %s76
      %s78 = ssub.s32 %s21, %s32
      %s79 = sor.u32 %s77, %s78
      %p80 = scmp.eq.s32.totalorder %s79, 0
      %s82 = sadd.s32 %s81, 1
      %s83 = scalar_select %p80, %s81, %s82
      %p86 = pneg %p80
      %p87 = scmp.eq.s32.totalorder %s11, 1
      %p88 = por %p86, %p87
      %p89 = scmp.ne.s32.totalorder %s81, %s84
      %p90 = scmp.eq.s32.totalorder %s11, 0
      %p91 = por %p89, %p90
      %p92 = scmp.ne.s32.totalorder %s81, %s84
      %p93 = scmp.eq.s32.totalorder %s16, 1
      %p94 = por %p92, %p93
      %p95 = scmp.ne.s32.totalorder %s84, %s85
      %p96 = scmp.eq.s32.totalorder %s16, 0
      %p97 = por %p95, %p96
      %p98 = scmp.ne.s32.totalorder %s84, %s85
      %p99 = scmp.eq.s32.totalorder %s17, 1
      %p100 = por %p98, %p99
      %p102 = scmp.ne.s32.totalorder %s85, %s101
      %p103 = scmp.eq.s32.totalorder %s17, 0
      %p104 = por %p102, %p103
      %s105 = ssub.s32 %s18, %s44
      %s106 = ssub.s32 %s19, %s40
      %s107 = sor.u32 %s105, %s106
      %s108 = ssub.s32 %s20, %s36
      %s109 = sor.u32 %s107, %s108
      %p110 = scmp.eq.s32.totalorder %s109, 0
      %s112 = sadd.s32 %s111, 1
      %s113 = scalar_select %p110, %s111, %s112
      %p116 = pneg %p110
      %p117 = scmp.eq.s32.totalorder %s11, 1
      %p118 = por %p116, %p117
      %p119 = scmp.ne.s32.totalorder %s111, %s114
      %p120 = scmp.eq.s32.totalorder %s11, 0
      %p121 = por %p119, %p120
      %p122 = scmp.ne.s32.totalorder %s111, %s114
      %p123 = scmp.eq.s32.totalorder %s16, 1
      %p124 = por %p122, %p123
      %p125 = scmp.ne.s32.totalorder %s114, %s115
      %p126 = scmp.eq.s32.totalorder %s16, 0
      %p127 = por %p125, %p126
      %p128 = scmp.ne.s32.totalorder %s114, %s115
      %p129 = scmp.eq.s32.totalorder %s17, 1
      %p130 = por %p128, %p129
      %p132 = scmp.ne.s32.totalorder %s115, %s131
      %p133 = scmp.eq.s32.totalorder %s17, 0
      %p134 = por %p132, %p133
      %p135 = scmp.le.s32.totalorder 1, %s11
      %p136 = scmp.lt.s32.totalorder %s11, 3
      %p137 = pnand %p135, %p136
      %p138 = pneg %p137
      // Predicated region
      $region9: #{permute_bmm.1} parent=5 // pred_check
        _
      $region10: #{permute_bmm.1} parent=5 // pred_check_branch
        %140 = sbr.rel (%p137) target = $region12
      $region11: #{permute_bmm.1} parent=5 // pred_region
        %s141 = ssub.s32 %s11, 1
      $region12: #{permute_bmm.1} parent=5 // pred_fallthru
        _
      %p142 = scmp.lt.s32.totalorder %s11, 2
      // Predicated region
      $region13: #{permute_bmm.1} parent=5 // pred_check
        %p143 = pneg %p142
      $region14: #{permute_bmm.1} parent=5 // pred_check_branch
        %145 = sbr.rel (%p143) target = $region16
      $region15: #{permute_bmm.1} parent=5 // pred_region
        // Predicated region
        $region17: #{permute_bmm.1} parent=15 // pred_check
          %p146 = pneg %p61
        $region18: #{permute_bmm.1} parent=15 // pred_check_branch
          %148 = sbr.rel (%p146) target = $region20
        $region19: #{permute_bmm.1} parent=15 // pred_region
          %p149 = scmp.lt.s32.totalorder %s18, 1
          %s150 = scalar_select %p149, %s18, 1
          %p151 = scmp.lt.s32.totalorder %s19, 0
          %s152 = scalar_select %p151, %s19, 0
          %p153 = scmp.lt.s32.totalorder %s21, 0
          %s154 = scalar_select %p153, %s21, 0
          %s155 = sadd.s32 %s154, %s152
          %s156 = sadd.s32 %s155, %s150
          %s157 = smul.addr %s156, 8
          %s158 = scalar_lea.vmem %s0, %s157
        $region20: #{permute_bmm.1} parent=15 // pred_fallthru
          _
        // Predicated region
        $region21: #{permute_bmm.1} parent=15 // pred_check
          %p159 = pneg %p91
        $region22: #{permute_bmm.1} parent=15 // pred_check_branch
          %161 = sbr.rel (%p159) target = $region24
        $region23: #{permute_bmm.1} parent=15 // pred_region
          %s162 = smul.u32 2, %s20
          %p163 = scmp.lt.s32.totalorder %s18, 1
          %s164 = scalar_select %p163, %s18, 1
          %p165 = scmp.lt.s32.totalorder %s162, 1
          %s166 = scalar_select %p165, %s162, 1
          %p167 = scmp.lt.s32.totalorder %s21, 0
          %s168 = scalar_select %p167, %s21, 0
          %s169 = sadd.s32 %s168, %s166
          %s170 = smul.addr %s164, 2
          %s171 = sadd.s32 %s169, %s170
          %s172 = smul.addr %s171, 8
          %s173 = scalar_lea.vmem %s1, %s172
          %s174 = smul.u32 2, %s20
        $region24: #{permute_bmm.1} parent=15 // pred_fallthru
          _
      $region16: #{permute_bmm.1} parent=5 // pred_fallthru
        _
      %p175 = scmp.le.s32.totalorder 1, %s11
      %p176 = scmp.lt.s32.totalorder %s11, 3
      %p177 = pnand %p175, %p176
      %p178 = pneg %p177
      // Predicated region
      $region25: #{permute_bmm.1} parent=5 // pred_check
        _
      $region26: #{permute_bmm.1} parent=5 // pred_check_branch
        %180 = sbr.rel (%p177) target = $region28
      $region27: #{permute_bmm.1} parent=5 // pred_region
        %s181 = ssub.s32 %s11, 1
        %p182 = scmp.lt.s32.totalorder %s22, 1
        %s183 = scalar_select %p182, %s22, 1
        %p184 = scmp.lt.s32.totalorder %s23, 0
        %s185 = scalar_select %p184, %s23, 0
        %p186 = scmp.lt.s32.totalorder %s25, 0
        %s187 = scalar_select %p186, %s25, 0
        %s188 = sadd.s32 %s187, %s185
        %s189 = sadd.s32 %s188, %s183
        %s190 = smul.addr %s189, 8
        %s191 = scalar_lea.vmem %s0, %s190
        %p192 = pneg %p67
        %p193 = pneg %p64
        %s194 = smul.u32 2, %s24
        %p195 = scmp.lt.s32.totalorder %s22, 1
        %s196 = scalar_select %p195, %s22, 1
        %p197 = scmp.lt.s32.totalorder %s194, 1
        %s198 = scalar_select %p197, %s194, 1
        %p199 = scmp.lt.s32.totalorder %s25, 0
        %s200 = scalar_select %p199, %s25, 0
        %s201 = sadd.s32 %s200, %s198
        %s202 = smul.addr %s196, 2
        %s203 = sadd.s32 %s201, %s202
        %s204 = smul.addr %s203, 8
        %s205 = scalar_lea.vmem %s1, %s204
        %p206 = pneg %p97
        %p207 = pneg %p94
        %p208 = pneg %p127
        %p209 = pneg %p124
        %s210 = sand.u32 %s114, 1
        %s211 = scalar_lea.sflag [#allocation3], %s210
        %s212 = sand.u32 %s114, 1
        %s213 = smul.addr %s212, 8
        %s214 = scalar_lea.vmem [#allocation2], %s213
        %p215 = scmp.lt.s32.totalorder %s22, 1
        %s216 = scalar_select %p215, %s22, 1
        %p217 = scmp.lt.s32.totalorder %s23, 0
        %s218 = scalar_select %p217, %s23, 0
        %p219 = scmp.lt.s32.totalorder %s25, 0
        %s220 = scalar_select %p219, %s25, 0
        %s221 = sadd.s32 %s220, %s218
        %s222 = sadd.s32 %s221, %s216
        %s223 = smul.addr %s222, 8
        %s224 = scalar_lea.vmem %s0, %s223
        %s225 = smul.u32 2, %s24
        %p226 = scmp.lt.s32.totalorder %s22, 1
        %s227 = scalar_select %p226, %s22, 1
        %p228 = scmp.lt.s32.totalorder %s225, 1
        %s229 = scalar_select %p228, %s225, 1
        %p230 = scmp.lt.s32.totalorder %s25, 0
        %s231 = scalar_select %p230, %s25, 0
        %s232 = sadd.s32 %s231, %s229
        %s233 = smul.addr %s227, 2
        %s234 = sadd.s32 %s232, %s233
        %s235 = smul.addr %s234, 8
        %s236 = scalar_lea.vmem %s1, %s235
        %s237 = smul.u32 2, %s24
        %p238 = scmp.eq.s32.totalorder %s25, 0
        // Predicated region
        $region29: #{permute_bmm.1} parent=27 // pred_check
          %p239 = pneg %p238
        $region30: #{permute_bmm.1} parent=27 // pred_check_branch
          %241 = sbr.rel (%p239) target = $region32
        $region31: #{permute_bmm.1} parent=27 // pred_region
          %vm242 = vcmask 130048
          %243 = vst.msk [vmem:[%s214] sm:$0xff] %vm242, 0.0
        $region32: #{permute_bmm.1} parent=27 // pred_fallthru
          _
        %v244 = vld [vmem:[%s214] sm:$0xff]
        %v245 = vld [vmem:[%s224] sm:$0xff]
        %v246 = vld [vmem:[%s236] sm:$0xff]
        %v247 = vld [vmem:[%s236 + $0x8] sm:$0xff]
        %vm248 = vcmask 261120
        %v250 = vsel %vm248, %v245, 0
        %v253 = vsel %vm248, %v246, 0
        %v256 = vsel %vm248, %v247, 0
        %258 = vmatprep.subr.mxu0 0.0
        %259 = vmatpush1.xpose.msra.mxu0 %v253
        %260 = vmatprep.subr.mxu0 0.0
        %261 = vmatpush1.xpose.msra.mxu0 %v256
        %262 = vmatprep.subr.mxu0 0.0
        %263 = vmatpush1.xpose.msra.mxu0 0.0
        %264 = vmatprep.subr.mxu0 0.0
        %265 = vmatpush1.xpose.msra.mxu0 0.0
        %266 = vmatprep.subr.mxu0 0.0
        %267 = vmatpush1.xpose.msra.mxu0 0.0
        %268 = vmatprep.subr.mxu0 0.0
        %269 = vmatpush1.xpose.msra.mxu0 0.0
        %270 = vmatprep.subr.mxu0 0.0
        %271 = vmatpush1.xpose.msra.mxu0 0.0
        %272 = vmatprep.subr.mxu0 0.0
        %273 = vmatpush1.xpose.msra.mxu0 0.0
        %274 = vmatprep.subr.mxu0 0.0
        %275 = vmatpush1.xpose.msra.mxu0 0.0
        %276 = vmatprep.subr.mxu0 0.0
        %277 = vmatpush1.xpose.msra.mxu0 0.0
        %278 = vmatprep.subr.mxu0 0.0
        %279 = vmatpush1.xpose.msra.mxu0 0.0
        %280 = vmatprep.subr.mxu0 0.0
        %281 = vmatpush1.xpose.msra.mxu0 0.0
        %282 = vmatprep.subr.mxu0 0.0
        %283 = vmatpush1.xpose.msra.mxu0 0.0
        %284 = vmatprep.subr.mxu0 0.0
        %285 = vmatpush1.xpose.msra.mxu0 0.0
        %286 = vmatprep.subr.mxu0 0.0
        %287 = vmatpush1.xpose.msra.mxu0 0.0
        %288 = vmatprep.subr.mxu0 0.0
        %289 = vmatpush1.xpose.msra.mxu0 0.0
        %290 = vmatprep.subr.mxu0 0.0
        %291 = vmatpush1.xpose.msra.mxu0 0.0
        %292 = vmatprep.subr.mxu0 0.0
        %293 = vmatpush1.xpose.msra.mxu0 0.0
        %294 = vmatprep.subr.mxu0 0.0
        %295 = vmatpush1.xpose.msra.mxu0 0.0
        %296 = vmatprep.subr.mxu0 0.0
        %297 = vmatpush1.xpose.msra.mxu0 0.0
        %298 = vmatprep.subr.mxu0 0.0
        %299 = vmatpush1.xpose.msra.mxu0 0.0
        %300 = vmatprep.subr.mxu0 0.0
        %301 = vmatpush1.xpose.msra.mxu0 0.0
        %302 = vmatprep.subr.mxu0 0.0
        %303 = vmatpush1.xpose.msra.mxu0 0.0
        %304 = vmatprep.subr.mxu0 0.0
        %305 = vmatpush1.xpose.msra.mxu0 0.0
        %306 = vmatprep.subr.mxu0 0.0
        %307 = vmatpush1.xpose.msra.mxu0 0.0
        %308 = vmatprep.subr.mxu0 0.0
        %309 = vmatpush1.xpose.msra.mxu0 0.0
        %310 = vmatprep.subr.mxu0 0.0
        %311 = vmatpush1.xpose.msra.mxu0 0.0
        %312 = vmatprep.subr.mxu0 0.0
        %313 = vmatpush1.xpose.msra.mxu0 0.0
        %314 = vmatprep.subr.mxu0 0.0
        %315 = vmatpush1.xpose.msra.mxu0 0.0
        %316 = vmatprep.subr.mxu0 0.0
        %317 = vmatpush1.xpose.msra.mxu0 0.0
        %318 = vmatprep.subr.mxu0 0.0
        %319 = vmatpush1.xpose.msra.mxu0 0.0
        %320 = vmatprep.subr.mxu0 0.0
        %321 = vmatpush1.xpose.msra.mxu0 0.0
        %322 = vmatprep.mubr.f32.mxu0 0.0
        %323 = vmatmul.mubr.f32.gmra.mrb[0].mxu0 %v250
        %v324 = vpop.f32.mrb[0].mxu0
        %v325 = vadd.f32 0.0, %v324
        %v326 = vpop.f32.mrb[0].mxu0
        %327 = vdwg.mxu0
        %v328 = vadd.f32 %v244, %v325
        %vm329 = vcmask 130048
        %330 = vst.msk [vmem:[%s214] sm:$0xff] %vm329, %v328
        %s331 = sand.u32 %s114, 1
        %s332 = scalar_lea.sflag [#allocation3], %s331
        %s333 = sand.u32 %s114, 1
        %s334 = smul.addr %s333, 8
        %s335 = scalar_lea.vmem [#allocation2], %s334
        // Predicated region
        $region33: #{permute_bmm.1} parent=27 // pred_check
          %p336 = pneg %p124
        $region34: #{permute_bmm.1} parent=27 // pred_check_branch
          %338 = sbr.rel (%p336) target = $region36
        $region35: #{permute_bmm.1} parent=27 // pred_region
          %s340 = ssub.s32 128, 128
          %341 = vsyncadd %s332, %s340
          %s342 = sadd.s32 %s24, %s23
          %s343 = sadd.s32 %s342, %s22
          %s344 = smul.addr %s343, 128
          %s345 = scalar_lea.hbm %s2, %s344
          %s347 = sshll.u32 %s335, 4
          %s348 = int_to_ptr.vmem [resolvable:$true] %s347
          %350 = dma.vmem_to_hbm [thread:$0]  %s348, 128, %s345, %s332
        $region36: #{permute_bmm.1} parent=27 // pred_fallthru
          _
      $region28: #{permute_bmm.1} parent=5 // pred_fallthru
        _
      %p351 = scmp.le.s32.totalorder 2, %s11
      // Predicated region
      $region37: #{permute_bmm.1} parent=5 // pred_check
        %p352 = pneg %p351
      $region38: #{permute_bmm.1} parent=5 // pred_check_branch
        %354 = sbr.rel (%p352) target = $region40
      $region39: #{permute_bmm.1} parent=5 // pred_region
        %s355 = ssub.s32 %s11, 2
        // Predicated region
        $region41: #{permute_bmm.1} parent=39 // pred_check
          %p356 = pneg %p130
        $region42: #{permute_bmm.1} parent=39 // pred_check_branch
          %358 = sbr.rel (%p356) target = $region44
        $region43: #{permute_bmm.1} parent=39 // pred_region
          %s359 = sand.u32 %s115, 1
          %s360 = scalar_lea.sflag [#allocation3], %s359
          %s361 = sand.u32 %s115, 1
          %s362 = smul.addr %s361, 8
          %s363 = scalar_lea.vmem [#allocation2], %s362
          %364 = dma.done %s360, 128
        $region44: #{permute_bmm.1} parent=39 // pred_fallthru
          _
      $region40: #{permute_bmm.1} parent=5 // pred_fallthru
        _
    $region6: #{permute_bmm.1} parent=1 // loop_footer
      %s15 = sadd.s32 1, %s11
    $region7: #{permute_bmm.1} parent=1 // loop_footer_branch
      %10 = sbr.rel target = $region3
    $region8: #{permute_bmm.1} parent=1 // loop_exit
      _
    %365 = vsyncpa [#allocation3], 1
    %s366 = scalar_lea.sflag [#allocation3], 1
    %367 = vsyncpa %s366, 1

</llo_original>
